<compile_context>
chip_gen: v7x
topology: tpu7x:2x2x1
jax: 0.10.0
libtpu: 0.0.40
codegen_flags: <defaults>
</compile_context>

<pallas_src>
import jax
import jax.numpy as jnp
from jax.experimental import pallas as pl
from jax.experimental.pallas import tpu as pltpu


def _round_up(v, m):
    return ((v + m - 1) // m) * m


def _largest_divisor_tile(dim):
    """Largest of (512, 256, 128) dividing dim (dim is a multiple of 128)."""
    for t in (512, 256, 128):
        if dim % t == 0:
            return t
    return dim


def _pick_m_tile(n, granule, single_tile_max=1024):
    """(tm, mp): single M tile rounded to the sublane granule when small,
    otherwise the 512/256 tile minimizing padded rows."""
    mp_single = _round_up(n, granule)
    if mp_single <= single_tile_max:
        return mp_single, mp_single
    best_tm, best_mp = None, None
    for tm in (512, 256):
        mp = _round_up(n, tm)
        if best_mp is None or mp < best_mp:
            best_tm, best_mp = tm, mp
    return best_tm, best_mp


def _vmem_limit_bytes(est_bytes):
    """Per-chip VMEM cap: ~75% of physical VMEM, fallback 48 MiB ceiling."""
    cap = 64 * 1024 * 1024
    try:
        info = pltpu.get_tpu_info()
        cap = int(getattr(info, "vmem_capacity_bytes", cap) or cap)
    except Exception:
        pass
    ceiling = (cap * 3) // 4
    return int(min(max(2 * est_bytes, 8 * 1024 * 1024), ceiling))


# ---------------------------------------------------------------------------
# Kernels
# ---------------------------------------------------------------------------

def _linear_resident_kernel(x_ref, w_ref, b_ref, o_ref):
    """Whole (padded) weight resident in VMEM; grid is M-only."""
    o_ref[...] = (
        jnp.dot(x_ref[...], w_ref[...], preferred_element_type=jnp.float32)
        + b_ref[...]
    ).astype(o_ref.dtype)


def _linear_tiled_kernel_f32out(x_ref, w_ref, b_ref, o_ref):
    """K-tiled fallback, f32 output: accumulate directly into o_ref."""
    k = pl.program_id(2)

    @pl.when(k == 0)
    def _init():
        o_ref[...] = jnp.zeros_like(o_ref)

    o_ref[...] += jnp.dot(x_ref[...], w_ref[...],
                          preferred_element_type=jnp.float32)

    @pl.when(k == pl.num_programs(2) - 1)
    def _finalize():
        o_ref[...] += b_ref[...]


def _linear_tiled_kernel_scratch(x_ref, w_ref, b_ref, o_ref, acc_ref):
    """K-tiled fallback, non-f32 output: f32 scratch accumulator."""
    k = pl.program_id(2)

    @pl.when(k == 0)
    def _init():
        acc_ref[...] = jnp.zeros_like(acc_ref)

    acc_ref[...] += jnp.dot(x_ref[...], w_ref[...],
                            preferred_element_type=jnp.float32)

    @pl.when(k == pl.num_programs(2) - 1)
    def _finalize():
        o_ref[...] = (acc_ref[...] + b_ref[...]).astype(o_ref.dtype)


# ---------------------------------------------------------------------------
# Parameter prep (one-time) and forward (hot path)
# ---------------------------------------------------------------------------

def prepare_linear_conv_params(weight, bias, *, compute_dtype=jnp.bfloat16,
                               max_resident_w_bytes=12 * 1024 * 1024):
    """One-time parameter prep (call once, NOT per forward).

    weight: [out_channels, in_channels]  (PyTorch nn.Linear layout)
    bias:   [out_channels] or None

    Transposes the weight to [in_channels, out_channels] a single time,
    casts to compute_dtype (bf16 by default), and zero-pads K / N only up to
    the 128-lane granule so the per-call hot path does no weight re-layout
    and output stores are full-width vst's.
    """
    cout, cin = weight.shape
    kp = _round_up(cin, 128)
    np_ = _round_up(cout, 128)

    w_t = jnp.transpose(weight)                          # [cin, cout], once
    if compute_dtype is not None:
        w_t = w_t.astype(compute_dtype)
    if (kp, np_) != (cin, cout):
        w_t = jnp.pad(w_t, ((0, kp - cin), (0, np_ - cout)))

    if bias is None:
        b = jnp.zeros((cout,), jnp.float32)
    else:
        b = bias.astype(jnp.float32)
    if np_ != cout:
        b = jnp.pad(b, (0, np_ - cout))
    b_p = b.reshape(1, np_)

    w_bytes = kp * np_ * jnp.dtype(w_t.dtype).itemsize
    resident = w_bytes <= max_resident_w_bytes

    return dict(w=w_t, b=b_p, in_channels=cin, out_channels=cout,
                kp=kp, np=np_, resident=resident,
                tk=_largest_divisor_tile(kp), tn=_largest_divisor_tile(np_),
                compute_dtype=compute_dtype)


def linear_conv_forward(x, params, edge_index=None, edge_weight=None):
    """Pallas LinearConv.forward: y = x @ W^T + b.

    x: [N, in_channels]; edge_index / edge_weight are accepted but unused
    (as in the reference module's forward).
    """
    del edge_index, edge_weight  # ignored by the reference forward
    n, cin = x.shape
    assert cin == params["in_channels"]
    cout = params["out_channels"]
    kp, np_ = params["kp"], params["np"]
    w_p, b_p = params["w"], params["b"]

    out_dtype = x.dtype
    if params["compute_dtype"] is not None:
        x = x.astype(params["compute_dtype"])

    x_itemsize = jnp.dtype(x.dtype).itemsize
    w_itemsize = jnp.dtype(w_p.dtype).itemsize
    out_itemsize = jnp.dtype(out_dtype).itemsize
    granule = max(8, 32 // x_itemsize)        # 8 f32, 16 bf16, 32 8-bit

    tm, mp = _pick_m_tile(n, granule)
    if mp != n or kp != cin:
        x = jnp.pad(x, ((0, mp - n), (0, kp - cin)))

    if params["resident"]:
        # Weight + bias VMEM-resident; grid walks M only.
        est = (2 * tm * kp * x_itemsize            # x double-buffered
               + 2 * kp * np_ * w_itemsize         # W (constant index)
               + 2 * np_ * 4                       # bias
               + 2 * tm * np_ * out_itemsize)      # output double-buffered
        out_p = pl.pallas_call(
            _linear_resident_kernel,
            out_shape=jax.ShapeDtypeStruct((mp, np_), out_dtype),
            grid_spec=pltpu.PrefetchScalarGridSpec(
                num_scalar_prefetch=0,
                grid=(mp // tm,),
                in_specs=[
                    pl.BlockSpec((tm, kp), lambda i: (i, 0)),    # x tile
                    pl.BlockSpec((kp, np_), lambda i: (0, 0)),   # resident W
                    pl.BlockSpec((1, np_), lambda i: (0, 0)),    # bias
                ],
                out_specs=pl.BlockSpec((tm, np_), lambda i: (i, 0)),
            ),
            compiler_params=pltpu.CompilerParams(
                dimension_semantics=("parallel",),
                vmem_limit_bytes=_vmem_limit_bytes(est),
            ),
        )(x, w_p, b_p)
    else:
        # Large-weight fallback: (M, N, K) grid, K innermost.
        tk, tn = params["tk"], params["tn"]
        grid = (mp // tm, np_ // tn, kp // tk)
        est = (2 * (tm * tk * x_itemsize + tk * tn * w_itemsize
                    + tn * 4 + tm * tn * out_itemsize)
               + tm * tn * 4)
        if jnp.dtype(out_dtype) == jnp.dtype(jnp.float32):
            kernel, scratch = _linear_tiled_kernel_f32out, []
        else:
            kernel = _linear_tiled_kernel_scratch
            scratch = [pltpu.VMEM((tm, tn), jnp.float32)]
        out_p = pl.pallas_call(
            kernel,
            out_shape=jax.ShapeDtypeStruct((mp, np_), out_dtype),
            grid_spec=pltpu.PrefetchScalarGridSpec(
                num_scalar_prefetch=0,
                grid=grid,
                in_specs=[
                    pl.BlockSpec((tm, tk), lambda i, j, k: (i, k)),
                    pl.BlockSpec((tk, tn), lambda i, j, k: (k, j)),
                    pl.BlockSpec((1, tn), lambda i, j, k: (0, j)),
                ],
                out_specs=pl.BlockSpec((tm, tn), lambda i, j, k: (i, j)),
                scratch_shapes=scratch,
            ),
            compiler_params=pltpu.CompilerParams(
                dimension_semantics=("parallel", "parallel", "arbitrary"),
                vmem_limit_bytes=_vmem_limit_bytes(est),
            ),
        )(x, w_p, b_p)

    # Slice away M / N padding only when padding actually happened.
    if mp != n or np_ != cout:
        out_p = out_p[:n, :cout]
    return out_p


def init_linear_conv_params(key, in_channels, out_channels):
    """Deterministic init mirroring torch.nn.Linear (uniform +-1/sqrt(in))."""
    kw, kb = jax.random.split(key)
    bound = 1.0 / (in_channels ** 0.5)
    weight = jax.random.uniform(
        kw, (out_channels, in_channels), jnp.float32, -bound, bound)
    bias = jax.random.uniform(
        kb, (out_channels,), jnp.float32, -bound, bound)
    return weight, bias


if __name__ == "__main__":
    # --- Small shapes consistent with the module (node features + ignored edges).
    in_channels, out_channels = 32, 16
    num_nodes, num_edges = 8, 24

    key = jax.random.PRNGKey(0)
    kx, kp, ke, kx2, kp2 = jax.random.split(key, 5)

    x = jax.random.normal(kx, (num_nodes, in_channels), jnp.float32)
    weight, bias = init_linear_conv_params(kp, in_channels, out_channels)
    params = prepare_linear_conv_params(weight, bias)   # one-time transpose+pad+bf16
    edge_index = jax.random.randint(ke, (2, num_edges), 0, num_nodes)
    edge_weight = jnp.ones((num_edges,), jnp.float32)

    out = linear_conv_forward(x, params, edge_index, edge_weight)
    out = jax.block_until_ready(out)

    ref = jnp.dot(x, weight.T, precision=jax.lax.Precision.HIGHEST) + bias
    assert out.shape == (num_nodes, out_channels)
    assert jnp.allclose(out, ref, atol=2e-2, rtol=2e-2)

    # --- Resident-weight path at non-granule sizes: exercises pad/slice and
    # the single-M-tile (round_up to bf16 sublane granule) selection.
    n2, cin2, cout2 = 300, 384, 272
    x2 = jax.random.normal(kx2, (n2, cin2), jnp.float32)
    w2, b2 = init_linear_conv_params(kp2, cin2, cout2)
    params2 = prepare_linear_conv_params(w2, b2)
    out2 = jax.block_until_ready(linear_conv_forward(x2, params2))
    ref2 = jnp.dot(x2, w2.T, precision=jax.lax.Precision.HIGHEST) + b2
    assert out2.shape == (n2, cout2)
    assert jnp.allclose(out2, ref2, atol=2e-2, rtol=2e-2)

    # --- Force the large-weight tiled fallback (K/N grid, direct f32-output
    # accumulation) on the same data to exercise that code path too.
    params3 = prepare_linear_conv_params(w2, b2, max_resident_w_bytes=0)
    out3 = jax.block_until_ready(linear_conv_forward(x2, params3))
    assert out3.shape == (n2, cout2)
    assert jnp.allclose(out3, ref2, atol=2e-2, rtol=2e-2)

    print("KERNEL_OK")
</pallas_src>

<mosaic_0001>
module attributes {stable_mosaic.version = 11 : i64} {
  func.func @_linear_resident_kernel(%arg0: i32, %arg1: memref<16x128xbf16, #tpu.memory_space<vmem>>, %arg2: memref<128x128xbf16, #tpu.memory_space<vmem>>, %arg3: memref<1x128xf32, #tpu.memory_space<vmem>>, %arg4: memref<16x128xf32, #tpu.memory_space<vmem>>) attributes {dimension_semantics = [#tpu.dimension_semantics<parallel>], iteration_bounds = array<i64: 1>, scalar_prefetch = 0 : i64, scratch_operands = 0 : i64, tpu.core_type = #tpu.core_type<tc>, window_params = [{transform_indices = @transform_0, window_bounds = array<i64: 16, 128>}, {pipeline_mode = #tpu.pipeline_mode<synchronous>, transform_indices = @transform_1, window_bounds = array<i64: 128, 128>}, {pipeline_mode = #tpu.pipeline_mode<synchronous>, transform_indices = @transform_2, window_bounds = array<i64: 1, 128>}, {transform_indices = @transform_3, window_bounds = array<i64: 16, 128>}]} {
    %c0 = arith.constant 0 : index
    %c0_0 = arith.constant 0 : index
    %0 = vector.load %arg1[%c0, %c0_0] : memref<16x128xbf16, #tpu.memory_space<vmem>>, vector<16x128xbf16>
    %c0_1 = arith.constant 0 : index
    %c0_2 = arith.constant 0 : index
    %1 = vector.load %arg2[%c0_1, %c0_2] : memref<128x128xbf16, #tpu.memory_space<vmem>>, vector<128x128xbf16>
    %cst = arith.constant dense<0.000000e+00> : vector<16x128xf32>
    %2 = tpu.matmul %0, %1, %cst {dimension_numbers = #tpu.dot_dimension_numbers<[1], [0], [0], [1], [0, 0, 1, 1], [], []>} : vector<16x128xbf16>, vector<128x128xbf16>, vector<16x128xf32> -> vector<16x128xf32>
    %c0_3 = arith.constant 0 : index
    %c0_4 = arith.constant 0 : index
    %3 = vector.load %arg3[%c0_3, %c0_4] : memref<1x128xf32, #tpu.memory_space<vmem>>, vector<1x128xf32>
    %4 = vector.broadcast %3 : vector<1x128xf32> to vector<16x128xf32>
    %5 = arith.addf %2, %4 : vector<16x128xf32>
    %c0_5 = arith.constant 0 : index
    %c0_6 = arith.constant 0 : index
    %6 = vector.load %arg4[%c0_5, %c0_6] : memref<16x128xf32, #tpu.memory_space<vmem>>, vector<16x128xf32>
    tpu.vector_store %arg4[%c0_5, %c0_6], %5 {strides = array<i32>} : memref<16x128xf32, #tpu.memory_space<vmem>>, vector<16x128xf32>,
    return
  }
  func.func @transform_0(%arg0: i32) -> (i32, i32) {
    %c0_i32 = arith.constant 0 : i32
    %c0_i32_0 = arith.constant 0 : i32
    return %arg0, %c0_i32 : i32, i32
  }
  func.func @transform_1(%arg0: i32) -> (i32, i32) {
    %c0_i32 = arith.constant 0 : i32
    %c0_i32_0 = arith.constant 0 : i32
    %c0_i32_1 = arith.constant 0 : i32
    return %c0_i32, %c0_i32_0 : i32, i32
  }
  func.func @transform_2(%arg0: i32) -> (i32, i32) {
    %c0_i32 = arith.constant 0 : i32
    %c0_i32_0 = arith.constant 0 : i32
    %c0_i32_1 = arith.constant 0 : i32
    return %c0_i32, %c0_i32_0 : i32, i32
  }
  func.func @transform_3(%arg0: i32) -> (i32, i32) {
    %c0_i32 = arith.constant 0 : i32
    %c0_i32_0 = arith.constant 0 : i32
    return %arg0, %c0_i32 : i32, i32
  }
}

</mosaic_0001>

<llo_original>
// kernel: tpu_custom_call.1
$region0: #{tpu_custom_call.1}
  #allocation0 [shape = 'u32[]', space=smem, size = 0x4, offset = 0x4, fixed_abs, tag = 'smem constant byte address 0x4 - core index']
  #allocation1 [shape = 'u32[144,128]{1,0:T(1,128)}', space=vmem, size = 0x12000, scoped, tag = 'internal scratch']
  %s0 = inlined_call_operand.hbm [shape: bf16[16,128], index: 0, kind: input, shape index: {}]
  %s1 = inlined_call_operand.hbm [shape: bf16[128,128], index: 1, kind: input, shape index: {}]
  %s2 = inlined_call_operand.vmem [shape: f32[1,128], index: 2, kind: input, shape index: {}]
  %s3 = inlined_call_operand.hbm [shape: f32[16,128], index: 3, kind: output, shape index: {}]
  %s4 = sld [smem:[#allocation0]]
  $region30: #{tpu_custom_call.1} parent=0
    _
  %s6 = ssub.s32 1, %s4
  %s7 = scalar_select 0, %s6, %s4
  $region1: #{tpu_custom_call.1} parent=0
    #allocation2 [shape = 'u8[4096]{0}', space=vmem, size = 0x1000, scoped, tag = 'input window, operand 0, single buffered']
    #allocation3 [shape = 's32[1]{0}', space=sflag, size = 0x4, scoped, tag = 'scoped memory for tpu_custom_call.1']
    #allocation4 [shape = 's32[1]{0}', space=sflag, size = 0x4, scoped, tag = 'scoped memory for tpu_custom_call.1']
    #allocation5 [shape = 'u8[32768]{0}', space=vmem, size = 0x8000, scoped, tag = 'input window, operand 1, single buffered']
    #allocation6 [shape = 's32[1]{0}', space=sflag, size = 0x4, scoped, tag = 'scoped memory for tpu_custom_call.1']
    #allocation7 [shape = 'u8[8192]{0}', space=vmem, size = 0x2000, scoped, tag = 'output window, operand 0, single buffered']
    %8 = vsyncpa [#allocation3], 0
    %9 = vsyncpa [#allocation6], 0
    %10 = vsyncpa [#allocation4], 0
    // Predicated region
    $region2: #{tpu_custom_call.1} parent=1 // pred_check
      _
    $region3: #{tpu_custom_call.1} parent=1 // pred_check_branch
      %12 = sbr.rel (0) target = $region5
    $region4: #{tpu_custom_call.1} parent=1 // pred_region
      %s14 = ssub.s32 128, 128
      %15 = vsyncadd [#allocation3], %s14
      %s16 = sshll.u32 [#allocation2], 4
      %s17 = int_to_ptr.vmem [resolvable:$true] %s16
      %22 = dma.hbm_to_vmem [thread:$0]  %s0, 128, %s17, [#allocation3], 64, 64, 4
    $region5: #{tpu_custom_call.1} parent=1 // pred_fallthru
      _
    // Predicated region
    $region6: #{tpu_custom_call.1} parent=1 // pred_check
      _
    $region7: #{tpu_custom_call.1} parent=1 // pred_check_branch
      %24 = sbr.rel (0) target = $region9
    $region8: #{tpu_custom_call.1} parent=1 // pred_region
      %s26 = ssub.s32 1024, 1024
      %27 = vsyncadd [#allocation6], %s26
      %s28 = sshll.u32 [#allocation5], 4
      %s29 = int_to_ptr.vmem [resolvable:$true] %s28
      %34 = dma.hbm_to_vmem [thread:$0]  %s1, 1024, %s29, [#allocation6], 64, 64, 4
    $region9: #{tpu_custom_call.1} parent=1 // pred_fallthru
      _
    // Predicated region
    $region10: #{tpu_custom_call.1} parent=1 // pred_check
      _
    $region11: #{tpu_custom_call.1} parent=1 // pred_check_branch
      %36 = sbr.rel (0) target = $region13
    $region12: #{tpu_custom_call.1} parent=1 // pred_region
      _
    $region13: #{tpu_custom_call.1} parent=1 // pred_fallthru
      _
    // Predicated region
    $region14: #{tpu_custom_call.1} parent=1 // pred_check
      _
    $region15: #{tpu_custom_call.1} parent=1 // pred_check_branch
      %38 = sbr.rel (0) target = $region17
    $region16: #{tpu_custom_call.1} parent=1 // pred_region
      %39 = dma.done [#allocation3], 128
    $region17: #{tpu_custom_call.1} parent=1 // pred_fallthru
      _
    // Predicated region
    $region18: #{tpu_custom_call.1} parent=1 // pred_check
      _
    $region19: #{tpu_custom_call.1} parent=1 // pred_check_branch
      %41 = sbr.rel (0) target = $region21
    $region20: #{tpu_custom_call.1} parent=1 // pred_region
      %42 = dma.done [#allocation6], 1024
    $region21: #{tpu_custom_call.1} parent=1 // pred_fallthru
      _
    %v44 = vld [vmem:[#allocation2] sm:$0xf]
    %v45 = vld [vmem:[#allocation2 + $0x4] sm:$0xf]
    %v46 = vld [vmem:[#allocation5] sm:$0xf]
    %v47 = vld [vmem:[#allocation5 + $0x4] sm:$0xf]
    %v48 = vld [vmem:[#allocation5 + $0x8] sm:$0xf]
    %v49 = vld [vmem:[#allocation5 + $0xc] sm:$0xf]
    %v50 = vld [vmem:[#allocation5 + $0x10] sm:$0xf]
    %v51 = vld [vmem:[#allocation5 + $0x14] sm:$0xf]
    %v52 = vld [vmem:[#allocation5 + $0x18] sm:$0xf]
    %v53 = vld [vmem:[#allocation5 + $0x1c] sm:$0xf]
    %v54 = vld [vmem:[#allocation5 + $0x20] sm:$0xf]
    %v55 = vld [vmem:[#allocation5 + $0x24] sm:$0xf]
    %v56 = vld [vmem:[#allocation5 + $0x28] sm:$0xf]
    %v57 = vld [vmem:[#allocation5 + $0x2c] sm:$0xf]
    %v58 = vld [vmem:[#allocation5 + $0x30] sm:$0xf]
    %v59 = vld [vmem:[#allocation5 + $0x34] sm:$0xf]
    %v60 = vld [vmem:[#allocation5 + $0x38] sm:$0xf]
    %v61 = vld [vmem:[#allocation5 + $0x3c] sm:$0xf]
    %v62 = vld [vmem:[%s2] sm:$0x1]
    %v64 = vlaneseq
    %v65 = vshrl.u32 %v64, 7
    %v66 = vsub.s32 0, %v65
    %v67 = vrot.slane %v62, %v66
    %v71 = vunpack.c.l.b16 %v44
    %v72 = vunpack.c.l.b16 %v45
    %v73 = vpack.c.b16 %v72, %v71
    %v91 = vunpack.c.l.b16 %v46
    %v92 = vunpack.c.l.b16 %v47
    %v93 = vunpack.c.l.b16 %v48
    %v94 = vunpack.c.l.b16 %v49
    %v95 = vunpack.c.l.b16 %v50
    %v96 = vunpack.c.l.b16 %v51
    %v97 = vunpack.c.l.b16 %v52
    %v98 = vunpack.c.l.b16 %v53
    %v99 = vunpack.c.l.b16 %v54
    %v100 = vunpack.c.l.b16 %v55
    %v101 = vunpack.c.l.b16 %v56
    %v102 = vunpack.c.l.b16 %v57
    %v103 = vunpack.c.l.b16 %v58
    %v104 = vunpack.c.l.b16 %v59
    %v105 = vunpack.c.l.b16 %v60
    %v106 = vunpack.c.l.b16 %v61
    %v107 = vpack.c.b16 %v92, %v91
    %v108 = vpack.c.b16 %v94, %v93
    %v109 = vpack.c.b16 %v96, %v95
    %v110 = vpack.c.b16 %v98, %v97
    %v111 = vpack.c.b16 %v100, %v99
    %v112 = vpack.c.b16 %v102, %v101
    %v113 = vpack.c.b16 %v104, %v103
    %v114 = vpack.c.b16 %v106, %v105
    %123 = vmatprep.subr.bf16.mxu0 0
    %124 = vmatpush1.bf16.msra.mxu0 %v107
    %125 = vmatprep.subr.bf16.mxu0 0
    %126 = vmatpush1.bf16.msra.mxu0 %v108
    %127 = vmatprep.subr.bf16.mxu0 0
    %128 = vmatpush1.bf16.msra.mxu0 %v109
    %129 = vmatprep.subr.bf16.mxu0 0
    %130 = vmatpush1.bf16.msra.mxu0 %v110
    %131 = vmatprep.subr.bf16.mxu0 0
    %132 = vmatpush1.bf16.msra.mxu0 %v111
    %133 = vmatprep.subr.bf16.mxu0 0
    %134 = vmatpush1.bf16.msra.mxu0 %v112
    %135 = vmatprep.subr.bf16.mxu0 0
    %136 = vmatpush1.bf16.msra.mxu0 %v113
    %137 = vmatprep.subr.bf16.mxu0 0
    %138 = vmatpush1.bf16.msra.mxu0 %v114
    %139 = vmatprep.subr.bf16.mxu0 0
    %140 = vmatpush1.bf16.msra.mxu0 0
    %141 = vmatprep.subr.bf16.mxu0 0
    %142 = vmatpush1.bf16.msra.mxu0 0
    %143 = vmatprep.subr.bf16.mxu0 0
    %144 = vmatpush1.bf16.msra.mxu0 0
    %145 = vmatprep.subr.bf16.mxu0 0
    %146 = vmatpush1.bf16.msra.mxu0 0
    %147 = vmatprep.subr.bf16.mxu0 0
    %148 = vmatpush1.bf16.msra.mxu0 0
    %149 = vmatprep.subr.bf16.mxu0 0
    %150 = vmatpush1.bf16.msra.mxu0 0
    %151 = vmatprep.subr.bf16.mxu0 0
    %152 = vmatpush1.bf16.msra.mxu0 0
    %153 = vmatprep.subr.bf16.mxu0 0
    %154 = vmatpush1.bf16.msra.mxu0 0
    %155 = vmatprep.mubr.bf16.mxu0 0
    %156 = vmatmul.mubr.bf16.gmra.mrb[0].mxu0 %v73
    %v157 = vpop.f32.mrb[0].mxu0
    %v158 = vadd.f32 %v67, %v157
    %v159 = vpop.f32.mrb[0].mxu0
    %v160 = vpop.f32.mrb[0].mxu0
    %v161 = vadd.f32 %v67, %v160
    %v162 = vpop.f32.mrb[0].mxu0
    %163 = vdwg.mxu0
    %164 = vst [vmem:[#allocation7] sm:$0xff] %v158
    %165 = vst [vmem:[#allocation7 + $0x8] sm:$0xff] %v161
    // Predicated region
    $region22: #{tpu_custom_call.1} parent=1 // pred_check
      _
    $region23: #{tpu_custom_call.1} parent=1 // pred_check_branch
      %167 = sbr.rel (0) target = $region25
    $region24: #{tpu_custom_call.1} parent=1 // pred_region
      %s169 = ssub.s32 256, 256
      %170 = vsyncadd [#allocation4], %s169
      %s171 = sshll.u32 [#allocation7], 4
      %s172 = int_to_ptr.vmem [resolvable:$true] %s171
      %177 = dma.vmem_to_hbm [thread:$0]  %s172, 256, %s3, [#allocation4], 128, 128, 8
    $region25: #{tpu_custom_call.1} parent=1 // pred_fallthru
      _
    // Predicated region
    $region26: #{tpu_custom_call.1} parent=1 // pred_check
      _
    $region27: #{tpu_custom_call.1} parent=1 // pred_check_branch
      %179 = sbr.rel (0) target = $region29
    $region28: #{tpu_custom_call.1} parent=1 // pred_region
      %180 = dma.done [#allocation4], 256
    $region29: #{tpu_custom_call.1} parent=1 // pred_fallthru
      _
    %181 = vsyncpa [#allocation3], 1
    %182 = vsyncpa [#allocation6], 1
    %183 = vsyncpa [#allocation4], 1

</llo_original>
